<compile_context>
chip_gen: v7x
topology: tpu7x:2x2x1
jax: 0.10.0
libtpu: 0.0.40
codegen_flags: <defaults>
</compile_context>

<pallas_src>
import jax
import jax.numpy as jnp
from jax.experimental import pallas as pl
from jax.experimental.pallas import tpu as pltpu

LATENT_DIM = 32
BN_EPS = 1e-5
NEG_SLOPE = 0.01          # nn.LeakyReLU() default
_MAX_TILE_ROWS = 8192     # per-tile row budget (tile bytes = rows * 128 B)


def _cdiv(a, b):
    return -(-a // b)


def _leaky_relu(h):
    return jnp.where(h > 0, h, NEG_SLOPE * h)


def _choose_tile_rows(batch):
    if batch <= _MAX_TILE_ROWS:
        return max(8, ((batch + 7) // 8) * 8)          # single tile
    n_tiles = _cdiv(batch, _MAX_TILE_ROWS)
    t = _cdiv(batch, n_tiles)
    return ((t + 127) // 128) * 128                    # multi-tile: 128-aligned


# --------------------------------------------------------------------------
# Fused single-tile kernel: one HBM read of x, whole network in VMEM.
# --------------------------------------------------------------------------
def _make_fused_kernel(batch, need_mask):
    inv_b = 1.0 / float(batch)

    def kernel(x_ref,
               g1_ref, be1_ref, w1_ref, b1_ref,
               g2_ref, be2_ref, w2_ref, b2_ref,
               w3r_ref, b3_ref, o_ref):
        x = x_ref[...].astype(jnp.float32)

        # ---- BN1 (padded rows are zeros -> harmless in sum / sum^2) --------
        mean1 = jnp.sum(x, axis=0, keepdims=True) * inv_b
        var1 = jnp.sum(x * x, axis=0, keepdims=True) * inv_b - mean1 * mean1
        s1 = g1_ref[...] * jax.lax.rsqrt(var1 + BN_EPS)
        b1e = b1_ref[...] + jnp.dot(be1_ref[...] - mean1 * s1, w1_ref[...],
                                    preferred_element_type=jnp.float32)
        h = jnp.dot(x * s1, w1_ref[...],
                    preferred_element_type=jnp.float32) + b1e
        h = _leaky_relu(h)
        if need_mask:
            rows = jax.lax.broadcasted_iota(jnp.int32, h.shape, 0)
            h = jnp.where(rows < batch, h, 0.0)

        # ---- BN2 on h1 ------------------------------------------------------
        mean2 = jnp.sum(h, axis=0, keepdims=True) * inv_b
        var2 = jnp.sum(h * h, axis=0, keepdims=True) * inv_b - mean2 * mean2
        s2 = g2_ref[...] * jax.lax.rsqrt(var2 + BN_EPS)
        b2e = b2_ref[...] + jnp.dot(be2_ref[...] - mean2 * s2, w2_ref[...],
                                    preferred_element_type=jnp.float32)
        h = jnp.dot(h * s2, w2_ref[...],
                    preferred_element_type=jnp.float32) + b2e
        h = _leaky_relu(h)

        # ---- transposed head: (1,32) . (rows,32)^T -> lane-dense (1,rows) ---
        logits = jax.lax.dot_general(
            w3r_ref[...], h, (((1,), (1,)), ((), ())),
            preferred_element_type=jnp.float32) + b3_ref[...]
        o_ref[...] = jax.nn.sigmoid(logits)

    return kernel


# --------------------------------------------------------------------------
# Tiled kernel 1: full-batch BN statistics + BN->Linear folding (2 x passes).
# --------------------------------------------------------------------------
def _make_stats_fold_kernel(batch, tile_rows, need_mask):
    inv_b = 1.0 / float(batch)

    def kernel(x_ref,
               g1_ref, be1_ref, w1_ref, b1_ref,
               g2_ref, be2_ref, w2_ref, b2_ref,
               ab1_ref, ab2_ref,
               sum_ref, sq_ref, fold_ref):
        p = pl.program_id(0)            # 0: stats of x, 1: stats of h1
        t = pl.program_id(1)            # batch tile
        last = pl.num_programs(1) - 1

        @pl.when(t == 0)
        def _zero():
            sum_ref[...] = jnp.zeros_like(sum_ref)
            sq_ref[...] = jnp.zeros_like(sq_ref)

        x = x_ref[...].astype(jnp.float32)

        @pl.when(p == 0)
        def _acc_x():
            # Padded rows are zeros -> contribute nothing to sum / sum^2.
            sum_ref[...] += jnp.sum(x, axis=0, keepdims=True)
            sq_ref[...] += jnp.sum(x * x, axis=0, keepdims=True)

        @pl.when(p == 1)
        def _acc_h1():
            s1 = fold_ref[0:1, :]
            b1e = fold_ref[1:2, :]
            h = jnp.dot(x * s1, w1_ref[...],
                        preferred_element_type=jnp.float32) + b1e
            h = _leaky_relu(h)
            if need_mask:
                rows = (jax.lax.broadcasted_iota(jnp.int32, h.shape, 0)
                        + t * tile_rows)
                h = jnp.where(rows < batch, h, 0.0)
            sum_ref[...] += jnp.sum(h, axis=0, keepdims=True)
            sq_ref[...] += jnp.sum(h * h, axis=0, keepdims=True)

        @pl.when(jnp.logical_and(p == 0, t == last))
        def _fold1():
            mean = sum_ref[...] * inv_b
            var = sq_ref[...] * inv_b - mean * mean          # biased var
            s = g1_ref[...] * jax.lax.rsqrt(var + BN_EPS)
            be = b1_ref[...] + jnp.dot(be1_ref[...] - mean * s, w1_ref[...],
                                       preferred_element_type=jnp.float32)
            fold_ref[0:1, :] = s        # kept in scratch for pass 1
            fold_ref[1:2, :] = be
            ab1_ref[0:1, :] = s         # exported for the apply kernel
            ab1_ref[1:2, :] = be

        @pl.when(jnp.logical_and(p == 1, t == last))
        def _fold2():
            mean = sum_ref[...] * inv_b
            var = sq_ref[...] * inv_b - mean * mean
            s = g2_ref[...] * jax.lax.rsqrt(var + BN_EPS)
            be = b2_ref[...] + jnp.dot(be2_ref[...] - mean * s, w2_ref[...],
                                       preferred_element_type=jnp.float32)
            ab2_ref[0:1, :] = s
            ab2_ref[1:2, :] = be

    return kernel


# --------------------------------------------------------------------------
# Tiled kernel 2: folded forward pass, batch-parallel (megacore-shardable).
# --------------------------------------------------------------------------
def _apply_kernel(x_ref, ab1_ref, ab2_ref, w1_ref, w2_ref, w3r_ref, b3_ref,
                  o_ref):
    x = x_ref[...].astype(jnp.float32)
    h = jnp.dot(x * ab1_ref[0:1, :], w1_ref[...],
                preferred_element_type=jnp.float32) + ab1_ref[1:2, :]
    h = _leaky_relu(h)
    h = jnp.dot(h * ab2_ref[0:1, :], w2_ref[...],
                preferred_element_type=jnp.float32) + ab2_ref[1:2, :]
    h = _leaky_relu(h)
    # Transposed head: (1,32) . (tile,32)^T -> (1,tile); lane-dense row store.
    logits = jax.lax.dot_general(
        w3r_ref[...], h, (((1,), (1,)), ((), ())),
        preferred_element_type=jnp.float32) + b3_ref[...]
    o_ref[...] = jax.nn.sigmoid(logits)


# --------------------------------------------------------------------------
# Wrapper
# --------------------------------------------------------------------------
def discriminator_prior_forward(x, params, *, tile_rows=None):
    """x: [B, LATENT_DIM] float (f32 or bf16) -> [B, 1] float32 probabilities."""
    B, D = x.shape
    assert D == LATENT_DIM

    g1, be1, w1, b1, g2, be2, w2, b2, w3, b3 = [
        jnp.asarray(p, jnp.float32) for p in params]
    w3r = w3.reshape(1, D)                      # (32,1) -> (1,32) row

    if tile_rows is None:
        tile_rows = _choose_tile_rows(B)
    n_tiles = _cdiv(B, tile_rows)
    if n_tiles > 1:
        assert tile_rows % 128 == 0, "multi-tile runs need tile_rows % 128 == 0"
    assert tile_rows % 8 == 0
    b_pad = n_tiles * tile_rows
    if b_pad != B:
        x = jnp.pad(x, ((0, b_pad - B), (0, 0)))    # zero-pad extra rows

    vmem_limit = 32 * 1024 * 1024

    # ---- FAST PATH: whole batch in one VMEM tile -> fully fused kernel -----
    if n_tiles == 1:
        const1 = lambda i: (0, 0)
        out = pl.pallas_call(
            _make_fused_kernel(B, b_pad != B),
            out_shape=jax.ShapeDtypeStruct((1, b_pad), jnp.float32),
            grid_spec=pltpu.PrefetchScalarGridSpec(
                num_scalar_prefetch=0,
                grid=(1,),
                in_specs=[
                    pl.BlockSpec((b_pad, D), const1),          # x
                    pl.BlockSpec((1, D), const1),              # g1
                    pl.BlockSpec((1, D), const1),              # beta1
                    pl.BlockSpec((D, D), const1),              # w1
                    pl.BlockSpec((1, D), const1),              # b1
                    pl.BlockSpec((1, D), const1),              # g2
                    pl.BlockSpec((1, D), const1),              # beta2
                    pl.BlockSpec((D, D), const1),              # w2
                    pl.BlockSpec((1, D), const1),              # b2
                    pl.BlockSpec((1, D), const1),              # w3 (row)
                    pl.BlockSpec((1, 1), const1),              # b3
                ],
                out_specs=pl.BlockSpec((1, b_pad), const1),
            ),
            compiler_params=pltpu.CompilerParams(
                dimension_semantics=("arbitrary",),
                vmem_limit_bytes=vmem_limit),
        )(x, g1, be1, w1, b1, g2, be2, w2, b2, w3r, b3)
        return out[0, :B].reshape(B, 1)

    # ---- TILED PATH --------------------------------------------------------
    const = lambda *_: (0, 0)
    row_spec = pl.BlockSpec((1, D), const)
    mat_spec = pl.BlockSpec((D, D), const)
    cparams_serial = pltpu.CompilerParams(
        dimension_semantics=("arbitrary", "arbitrary"),
        vmem_limit_bytes=vmem_limit)
    cparams_parallel = pltpu.CompilerParams(
        dimension_semantics=("parallel",),
        vmem_limit_bytes=vmem_limit)

    # kernel 1: full-batch BN stats + folded (scale, bias) params
    ab1, ab2 = pl.pallas_call(
        _make_stats_fold_kernel(B, tile_rows, b_pad != B),
        out_shape=(jax.ShapeDtypeStruct((2, D), jnp.float32),
                   jax.ShapeDtypeStruct((2, D), jnp.float32)),
        grid_spec=pltpu.PrefetchScalarGridSpec(
            num_scalar_prefetch=0,
            grid=(2, n_tiles),
            in_specs=[
                pl.BlockSpec((tile_rows, D), lambda p, t: (t, 0)),
                row_spec, row_spec, mat_spec, row_spec,    # g1, be1, w1, b1
                row_spec, row_spec, mat_spec, row_spec,    # g2, be2, w2, b2
            ],
            out_specs=[pl.BlockSpec((2, D), const),
                       pl.BlockSpec((2, D), const)],
            scratch_shapes=[pltpu.VMEM((1, D), jnp.float32),   # sum
                            pltpu.VMEM((1, D), jnp.float32),   # sum of squares
                            pltpu.VMEM((2, D), jnp.float32)],  # folded s1/b1e
        ),
        compiler_params=cparams_serial,
    )(x, g1, be1, w1, b1, g2, be2, w2, b2)

    # kernel 2: apply the folded network, one pipelined pass over x
    out = pl.pallas_call(
        _apply_kernel,
        out_shape=jax.ShapeDtypeStruct((1, b_pad), jnp.float32),
        grid_spec=pltpu.PrefetchScalarGridSpec(
            num_scalar_prefetch=0,
            grid=(n_tiles,),
            in_specs=[
                pl.BlockSpec((tile_rows, D), lambda t: (t, 0)),
                pl.BlockSpec((2, D), const),
                pl.BlockSpec((2, D), const),
                mat_spec, mat_spec,
                row_spec,
                pl.BlockSpec((1, 1), const),
            ],
            out_specs=pl.BlockSpec((1, tile_rows), lambda t: (0, t)),
        ),
        compiler_params=cparams_parallel,
    )(x, ab1, ab2, w1, w2, w3r, b3)

    return out[0, :B].reshape(B, 1)


# --------------------------------------------------------------------------
# Parameters / reference
# --------------------------------------------------------------------------
def init_params(key):
    """Synthetic parameters. Linear weights stored [in, out]; BN gamma/beta
    and biases stored as (1, C) rows for TPU-friendly broadcasting."""
    ks = jax.random.split(key, 6)
    d = LATENT_DIM

    g1 = jnp.ones((1, d), jnp.float32)
    be1 = jnp.zeros((1, d), jnp.float32)
    w1 = jax.random.normal(ks[0], (d, d), jnp.float32) * (1.0 / jnp.sqrt(d))
    b1 = jax.random.normal(ks[1], (1, d), jnp.float32) * 0.01

    g2 = jnp.ones((1, d), jnp.float32)
    be2 = jnp.zeros((1, d), jnp.float32)
    w2 = jax.random.normal(ks[2], (d, d), jnp.float32) * (1.0 / jnp.sqrt(d))
    b2 = jax.random.normal(ks[3], (1, d), jnp.float32) * 0.01

    w3 = jax.random.normal(ks[4], (d, 1), jnp.float32) * (1.0 / jnp.sqrt(d))
    b3 = jax.random.normal(ks[5], (1, 1), jnp.float32) * 0.01

    return (g1, be1, w1, b1, g2, be2, w2, b2, w3, b3)


def _reference_forward(x, params):
    # Pure-JAX reference: PyTorch train-mode BN (biased stats), then the chain.
    # TODO(synk): running_mean/running_var buffer updates (training-mode side
    # effect of BatchNorm1d) are not modeled; forward output is unaffected.
    g1, be1, w1, b1, g2, be2, w2, b2, w3, b3 = params

    def bn(h, g, be):
        m = jnp.mean(h, axis=0, keepdims=True)
        v = jnp.mean((h - m) ** 2, axis=0, keepdims=True)
        return (h - m) * jax.lax.rsqrt(v + BN_EPS) * g + be

    h = _leaky_relu(bn(x, g1, be1) @ w1 + b1)
    h = _leaky_relu(bn(h, g2, be2) @ w2 + b2)
    return jax.nn.sigmoid(h @ w3 + b3)


if __name__ == "__main__":
    key = jax.random.PRNGKey(0)
    k_x, k_p, k_x2 = jax.random.split(key, 3)

    params = init_params(k_p)

    # Small demo batch (module input is (N, latent_dim) = (N, 32)) -> fused path.
    B = 8
    x = jax.random.normal(k_x, (B, LATENT_DIM), jnp.float32)
    y = jax.block_until_ready(discriminator_prior_forward(x, params))
    y_ref = _reference_forward(x, params)
    assert y.shape == (B, 1)
    assert jnp.allclose(y, y_ref, atol=2e-5, rtol=1e-4), "mismatch vs reference (B=8)"

    # Exercise the tiled/pipelined multi-tile path (incl. padding + masking).
    B2 = 1000
    x2 = jax.random.normal(k_x2, (B2, LATENT_DIM), jnp.float32)
    y2 = jax.block_until_ready(
        discriminator_prior_forward(x2, params, tile_rows=384))
    y2_ref = _reference_forward(x2, params)
    assert y2.shape == (B2, 1)
    assert jnp.allclose(y2, y2_ref, atol=2e-5, rtol=1e-4), "mismatch vs reference (B=1000)"

    print("KERNEL_OK")
</pallas_src>

<mosaic_0001>
module attributes {stable_mosaic.version = 11 : i64} {
  func.func @kernel(%arg0: i32, %arg1: memref<8x32xf32, #tpu.memory_space<vmem>>, %arg2: memref<1x32xf32, #tpu.memory_space<vmem>>, %arg3: memref<1x32xf32, #tpu.memory_space<vmem>>, %arg4: memref<32x32xf32, #tpu.memory_space<vmem>>, %arg5: memref<1x32xf32, #tpu.memory_space<vmem>>, %arg6: memref<1x32xf32, #tpu.memory_space<vmem>>, %arg7: memref<1x32xf32, #tpu.memory_space<vmem>>, %arg8: memref<32x32xf32, #tpu.memory_space<vmem>>, %arg9: memref<1x32xf32, #tpu.memory_space<vmem>>, %arg10: memref<1x32xf32, #tpu.memory_space<vmem>>, %arg11: memref<1x1xf32, #tpu.memory_space<vmem>>, %arg12: memref<1x8xf32, #tpu.memory_space<vmem>>) attributes {dimension_semantics = [#tpu.dimension_semantics<arbitrary>], iteration_bounds = array<i64: 1>, scalar_prefetch = 0 : i64, scratch_operands = 0 : i64, tpu.core_type = #tpu.core_type<tc>, window_params = [{pipeline_mode = #tpu.pipeline_mode<synchronous>, transform_indices = @transform_0, window_bounds = array<i64: 8, 32>}, {pipeline_mode = #tpu.pipeline_mode<synchronous>, transform_indices = @transform_1, window_bounds = array<i64: 1, 32>}, {pipeline_mode = #tpu.pipeline_mode<synchronous>, transform_indices = @transform_2, window_bounds = array<i64: 1, 32>}, {pipeline_mode = #tpu.pipeline_mode<synchronous>, transform_indices = @transform_3, window_bounds = array<i64: 32, 32>}, {pipeline_mode = #tpu.pipeline_mode<synchronous>, transform_indices = @transform_4, window_bounds = array<i64: 1, 32>}, {pipeline_mode = #tpu.pipeline_mode<synchronous>, transform_indices = @transform_5, window_bounds = array<i64: 1, 32>}, {pipeline_mode = #tpu.pipeline_mode<synchronous>, transform_indices = @transform_6, window_bounds = array<i64: 1, 32>}, {pipeline_mode = #tpu.pipeline_mode<synchronous>, transform_indices = @transform_7, window_bounds = array<i64: 32, 32>}, {pipeline_mode = #tpu.pipeline_mode<synchronous>, transform_indices = @transform_8, window_bounds = array<i64: 1, 32>}, {pipeline_mode = #tpu.pipeline_mode<synchronous>, transform_indices = @transform_9, window_bounds = array<i64: 1, 32>}, {pipeline_mode = #tpu.pipeline_mode<synchronous>, transform_indices = @transform_10, window_bounds = array<i64: 1, 1>}, {pipeline_mode = #tpu.pipeline_mode<synchronous>, transform_indices = @transform_11, window_bounds = array<i64: 1, 8>}]} {
    %c0 = arith.constant 0 : index
    %c0_0 = arith.constant 0 : index
    %0 = vector.load %arg1[%c0, %c0_0] : memref<8x32xf32, #tpu.memory_space<vmem>>, vector<8x32xf32>
    %cst = arith.constant dense<0.000000e+00> : vector<32xf32>
    %1 = vector.multi_reduction <add>, %0, %cst [0] : vector<8x32xf32> to vector<32xf32>
    %2 = vector.shape_cast %1 : vector<32xf32> to vector<1x32xf32>
    %cst_1 = arith.constant 1.250000e-01 : f32
    %3 = vector.broadcast %cst_1 : f32 to vector<1x32xf32>
    %4 = arith.mulf %2, %3 : vector<1x32xf32>
    %5 = arith.mulf %0, %0 : vector<8x32xf32>
    %cst_2 = arith.constant dense<0.000000e+00> : vector<32xf32>
    %6 = vector.multi_reduction <add>, %5, %cst_2 [0] : vector<8x32xf32> to vector<32xf32>
    %7 = vector.shape_cast %6 : vector<32xf32> to vector<1x32xf32>
    %cst_3 = arith.constant 1.250000e-01 : f32
    %8 = vector.broadcast %cst_3 : f32 to vector<1x32xf32>
    %9 = arith.mulf %7, %8 : vector<1x32xf32>
    %10 = arith.mulf %4, %4 : vector<1x32xf32>
    %11 = arith.subf %9, %10 : vector<1x32xf32>
    %c0_4 = arith.constant 0 : index
    %c0_5 = arith.constant 0 : index
    %12 = vector.load %arg2[%c0_4, %c0_5] : memref<1x32xf32, #tpu.memory_space<vmem>>, vector<1x32xf32>
    %cst_6 = arith.constant 9.99999974E-6 : f32
    %13 = vector.broadcast %cst_6 : f32 to vector<1x32xf32>
    %14 = arith.addf %11, %13 : vector<1x32xf32>
    %15 = math.rsqrt %14 : vector<1x32xf32>
    %16 = arith.mulf %12, %15 : vector<1x32xf32>
    %c0_7 = arith.constant 0 : index
    %c0_8 = arith.constant 0 : index
    %17 = vector.load %arg5[%c0_7, %c0_8] : memref<1x32xf32, #tpu.memory_space<vmem>>, vector<1x32xf32>
    %c0_9 = arith.constant 0 : index
    %c0_10 = arith.constant 0 : index
    %18 = vector.load %arg3[%c0_9, %c0_10] : memref<1x32xf32, #tpu.memory_space<vmem>>, vector<1x32xf32>
    %19 = arith.mulf %4, %16 : vector<1x32xf32>
    %20 = arith.subf %18, %19 : vector<1x32xf32>
    %c0_11 = arith.constant 0 : index
    %c0_12 = arith.constant 0 : index
    %21 = vector.load %arg4[%c0_11, %c0_12] : memref<32x32xf32, #tpu.memory_space<vmem>>, vector<32x32xf32>
    %cst_13 = arith.constant dense<0.000000e+00> : vector<1x32xf32>
    %22 = tpu.matmul %20, %21, %cst_13 {dimension_numbers = #tpu.dot_dimension_numbers<[1], [0], [0], [1], [0, 0, 1, 1], [], []>} : vector<1x32xf32>, vector<32x32xf32>, vector<1x32xf32> -> vector<1x32xf32>
    %23 = arith.addf %17, %22 : vector<1x32xf32>
    %24 = vector.broadcast %16 : vector<1x32xf32> to vector<8x32xf32>
    %25 = arith.mulf %0, %24 : vector<8x32xf32>
    %c0_14 = arith.constant 0 : index
    %c0_15 = arith.constant 0 : index
    %26 = vector.load %arg4[%c0_14, %c0_15] : memref<32x32xf32, #tpu.memory_space<vmem>>, vector<32x32xf32>
    %cst_16 = arith.constant dense<0.000000e+00> : vector<8x32xf32>
    %27 = tpu.matmul %25, %26, %cst_16 {dimension_numbers = #tpu.dot_dimension_numbers<[1], [0], [0], [1], [0, 0, 1, 1], [], []>} : vector<8x32xf32>, vector<32x32xf32>, vector<8x32xf32> -> vector<8x32xf32>
    %28 = vector.broadcast %23 : vector<1x32xf32> to vector<8x32xf32>
    %29 = arith.addf %27, %28 : vector<8x32xf32>
    %cst_17 = arith.constant 0.000000e+00 : f32
    %30 = vector.broadcast %cst_17 : f32 to vector<8x32xf32>
    %31 = arith.cmpf ogt, %29, %30 : vector<8x32xf32>
    %cst_18 = arith.constant 0.00999999977 : f32
    %32 = vector.broadcast %cst_18 : f32 to vector<8x32xf32>
    %33 = arith.mulf %32, %29 : vector<8x32xf32>
    %34 = arith.select %31, %29, %33 : vector<8x32xi1>, vector<8x32xf32>
    %cst_19 = arith.constant dense<0.000000e+00> : vector<32xf32>
    %35 = vector.multi_reduction <add>, %34, %cst_19 [0] : vector<8x32xf32> to vector<32xf32>
    %36 = vector.shape_cast %35 : vector<32xf32> to vector<1x32xf32>
    %cst_20 = arith.constant 1.250000e-01 : f32
    %37 = vector.broadcast %cst_20 : f32 to vector<1x32xf32>
    %38 = arith.mulf %36, %37 : vector<1x32xf32>
    %39 = arith.mulf %34, %34 : vector<8x32xf32>
    %cst_21 = arith.constant dense<0.000000e+00> : vector<32xf32>
    %40 = vector.multi_reduction <add>, %39, %cst_21 [0] : vector<8x32xf32> to vector<32xf32>
    %41 = vector.shape_cast %40 : vector<32xf32> to vector<1x32xf32>
    %cst_22 = arith.constant 1.250000e-01 : f32
    %42 = vector.broadcast %cst_22 : f32 to vector<1x32xf32>
    %43 = arith.mulf %41, %42 : vector<1x32xf32>
    %44 = arith.mulf %38, %38 : vector<1x32xf32>
    %45 = arith.subf %43, %44 : vector<1x32xf32>
    %c0_23 = arith.constant 0 : index
    %c0_24 = arith.constant 0 : index
    %46 = vector.load %arg6[%c0_23, %c0_24] : memref<1x32xf32, #tpu.memory_space<vmem>>, vector<1x32xf32>
    %cst_25 = arith.constant 9.99999974E-6 : f32
    %47 = vector.broadcast %cst_25 : f32 to vector<1x32xf32>
    %48 = arith.addf %45, %47 : vector<1x32xf32>
    %49 = math.rsqrt %48 : vector<1x32xf32>
    %50 = arith.mulf %46, %49 : vector<1x32xf32>
    %c0_26 = arith.constant 0 : index
    %c0_27 = arith.constant 0 : index
    %51 = vector.load %arg9[%c0_26, %c0_27] : memref<1x32xf32, #tpu.memory_space<vmem>>, vector<1x32xf32>
    %c0_28 = arith.constant 0 : index
    %c0_29 = arith.constant 0 : index
    %52 = vector.load %arg7[%c0_28, %c0_29] : memref<1x32xf32, #tpu.memory_space<vmem>>, vector<1x32xf32>
    %53 = arith.mulf %38, %50 : vector<1x32xf32>
    %54 = arith.subf %52, %53 : vector<1x32xf32>
    %c0_30 = arith.constant 0 : index
    %c0_31 = arith.constant 0 : index
    %55 = vector.load %arg8[%c0_30, %c0_31] : memref<32x32xf32, #tpu.memory_space<vmem>>, vector<32x32xf32>
    %cst_32 = arith.constant dense<0.000000e+00> : vector<1x32xf32>
    %56 = tpu.matmul %54, %55, %cst_32 {dimension_numbers = #tpu.dot_dimension_numbers<[1], [0], [0], [1], [0, 0, 1, 1], [], []>} : vector<1x32xf32>, vector<32x32xf32>, vector<1x32xf32> -> vector<1x32xf32>
    %57 = arith.addf %51, %56 : vector<1x32xf32>
    %58 = vector.broadcast %50 : vector<1x32xf32> to vector<8x32xf32>
    %59 = arith.mulf %34, %58 : vector<8x32xf32>
    %c0_33 = arith.constant 0 : index
    %c0_34 = arith.constant 0 : index
    %60 = vector.load %arg8[%c0_33, %c0_34] : memref<32x32xf32, #tpu.memory_space<vmem>>, vector<32x32xf32>
    %cst_35 = arith.constant dense<0.000000e+00> : vector<8x32xf32>
    %61 = tpu.matmul %59, %60, %cst_35 {dimension_numbers = #tpu.dot_dimension_numbers<[1], [0], [0], [1], [0, 0, 1, 1], [], []>} : vector<8x32xf32>, vector<32x32xf32>, vector<8x32xf32> -> vector<8x32xf32>
    %62 = vector.broadcast %57 : vector<1x32xf32> to vector<8x32xf32>
    %63 = arith.addf %61, %62 : vector<8x32xf32>
    %cst_36 = arith.constant 0.000000e+00 : f32
    %64 = vector.broadcast %cst_36 : f32 to vector<8x32xf32>
    %65 = arith.cmpf ogt, %63, %64 : vector<8x32xf32>
    %cst_37 = arith.constant 0.00999999977 : f32
    %66 = vector.broadcast %cst_37 : f32 to vector<8x32xf32>
    %67 = arith.mulf %66, %63 : vector<8x32xf32>
    %68 = arith.select %65, %63, %67 : vector<8x32xi1>, vector<8x32xf32>
    %c0_38 = arith.constant 0 : index
    %c0_39 = arith.constant 0 : index
    %69 = vector.load %arg10[%c0_38, %c0_39] : memref<1x32xf32, #tpu.memory_space<vmem>>, vector<1x32xf32>
    %cst_40 = arith.constant dense<0.000000e+00> : vector<1x8xf32>
    %70 = tpu.matmul %69, %68, %cst_40 {dimension_numbers = #tpu.dot_dimension_numbers<[1], [1], [0], [0], [0, 0, 1, 0], [], []>} : vector<1x32xf32>, vector<8x32xf32>, vector<1x8xf32> -> vector<1x8xf32>
    %c0_41 = arith.constant 0 : index
    %c0_42 = arith.constant 0 : index
    %71 = vector.load %arg11[%c0_41, %c0_42] : memref<1x1xf32, #tpu.memory_space<vmem>>, vector<1x1xf32>
    %72 = vector.broadcast %71 : vector<1x1xf32> to vector<1x8xf32>
    %73 = arith.addf %70, %72 : vector<1x8xf32>
    %74 = arith.negf %73 : vector<1x8xf32>
    %75 = math.exp %74 : vector<1x8xf32>
    %cst_43 = arith.constant 1.000000e+00 : f32
    %76 = vector.broadcast %cst_43 : f32 to vector<1x8xf32>
    %77 = arith.addf %76, %75 : vector<1x8xf32>
    %78 = arith.divf %76, %77 : vector<1x8xf32>
    %c0_44 = arith.constant 0 : index
    %c0_45 = arith.constant 0 : index
    %79 = vector.load %arg12[%c0_44, %c0_45] : memref<1x8xf32, #tpu.memory_space<vmem>>, vector<1x8xf32>
    tpu.vector_store %arg12[%c0_44, %c0_45], %78 {strides = array<i32>} : memref<1x8xf32, #tpu.memory_space<vmem>>, vector<1x8xf32>,
    return
  }
  func.func @transform_0(%arg0: i32) -> (i32, i32) {
    %c0_i32 = arith.constant 0 : i32
    %c0_i32_0 = arith.constant 0 : i32
    %c0_i32_1 = arith.constant 0 : i32
    return %c0_i32, %c0_i32_0 : i32, i32
  }
  func.func @transform_1(%arg0: i32) -> (i32, i32) {
    %c0_i32 = arith.constant 0 : i32
    %c0_i32_0 = arith.constant 0 : i32
    %c0_i32_1 = arith.constant 0 : i32
    return %c0_i32, %c0_i32_0 : i32, i32
  }
  func.func @transform_2(%arg0: i32) -> (i32, i32) {
    %c0_i32 = arith.constant 0 : i32
    %c0_i32_0 = arith.constant 0 : i32
    %c0_i32_1 = arith.constant 0 : i32
    return %c0_i32, %c0_i32_0 : i32, i32
  }
  func.func @transform_3(%arg0: i32) -> (i32, i32) {
    %c0_i32 = arith.constant 0 : i32
    %c0_i32_0 = arith.constant 0 : i32
    %c0_i32_1 = arith.constant 0 : i32
    return %c0_i32, %c0_i32_0 : i32, i32
  }
  func.func @transform_4(%arg0: i32) -> (i32, i32) {
    %c0_i32 = arith.constant 0 : i32
    %c0_i32_0 = arith.constant 0 : i32
    %c0_i32_1 = arith.constant 0 : i32
    return %c0_i32, %c0_i32_0 : i32, i32
  }
  func.func @transform_5(%arg0: i32) -> (i32, i32) {
    %c0_i32 = arith.constant 0 : i32
    %c0_i32_0 = arith.constant 0 : i32
    %c0_i32_1 = arith.constant 0 : i32
    return %c0_i32, %c0_i32_0 : i32, i32
  }
  func.func @transform_6(%arg0: i32) -> (i32, i32) {
    %c0_i32 = arith.constant 0 : i32
    %c0_i32_0 = arith.constant 0 : i32
    %c0_i32_1 = arith.constant 0 : i32
    return %c0_i32, %c0_i32_0 : i32, i32
  }
  func.func @transform_7(%arg0: i32) -> (i32, i32) {
    %c0_i32 = arith.constant 0 : i32
    %c0_i32_0 = arith.constant 0 : i32
    %c0_i32_1 = arith.constant 0 : i32
    return %c0_i32, %c0_i32_0 : i32, i32
  }
  func.func @transform_8(%arg0: i32) -> (i32, i32) {
    %c0_i32 = arith.constant 0 : i32
    %c0_i32_0 = arith.constant 0 : i32
    %c0_i32_1 = arith.constant 0 : i32
    return %c0_i32, %c0_i32_0 : i32, i32
  }
  func.func @transform_9(%arg0: i32) -> (i32, i32) {
    %c0_i32 = arith.constant 0 : i32
    %c0_i32_0 = arith.constant 0 : i32
    %c0_i32_1 = arith.constant 0 : i32
    return %c0_i32, %c0_i32_0 : i32, i32
  }
  func.func @transform_10(%arg0: i32) -> (i32, i32) {
    %c0_i32 = arith.constant 0 : i32
    %c0_i32_0 = arith.constant 0 : i32
    %c0_i32_1 = arith.constant 0 : i32
    return %c0_i32, %c0_i32_0 : i32, i32
  }
  func.func @transform_11(%arg0: i32) -> (i32, i32) {
    %c0_i32 = arith.constant 0 : i32
    %c0_i32_0 = arith.constant 0 : i32
    %c0_i32_1 = arith.constant 0 : i32
    return %c0_i32, %c0_i32_0 : i32, i32
  }
}

</mosaic_0001>

<llo_original>
// kernel: tpu_custom_call.1
$region0: #{tpu_custom_call.1}
  #allocation0 [shape = 'u32[]', space=smem, size = 0x4, offset = 0x4, fixed_abs, tag = 'smem constant byte address 0x4 - core index']
  #allocation1 [shape = 'u32[144,128]{1,0:T(1,128)}', space=vmem, size = 0x12000, scoped, tag = 'internal scratch']
  #allocation2 [shape = 'f32[1,1]{1,0:T(1,128)S(1)}', space=vmem, size = 0x200, scoped, tag = 'scoped memory for tpu_custom_call.1']
  %s0 = inlined_call_operand.hbm [shape: f32[8,32], index: 0, kind: input, shape index: {}]
  %s1 = inlined_call_operand.vmem [shape: f32[1,32], index: 1, kind: input, shape index: {}]
  %s2 = inlined_call_operand.vmem [shape: f32[1,32], index: 2, kind: input, shape index: {}]
  %s3 = inlined_call_operand.hbm [shape: f32[32,32], index: 3, kind: input, shape index: {}]
  %s4 = inlined_call_operand.vmem [shape: f32[1,32], index: 4, kind: input, shape index: {}]
  %s5 = inlined_call_operand.vmem [shape: f32[1,32], index: 5, kind: input, shape index: {}]
  %s6 = inlined_call_operand.vmem [shape: f32[1,32], index: 6, kind: input, shape index: {}]
  %s7 = inlined_call_operand.hbm [shape: f32[32,32], index: 7, kind: input, shape index: {}]
  %s8 = inlined_call_operand.vmem [shape: f32[1,32], index: 8, kind: input, shape index: {}]
  %s9 = inlined_call_operand.vmem [shape: f32[1,32], index: 9, kind: input, shape index: {}]
  %s10 = inlined_call_operand.<no memory space> [shape: f32[1,1], index: 10, kind: input, shape index: {}]
  %s11 = inlined_call_operand.hbm [shape: f32[1,8], index: 11, kind: output, shape index: {}]
  %s12 = sld [smem:[#allocation0]]
  $region66: #{tpu_custom_call.1} parent=0
    _
  %s14 = ssub.s32 1, %s12
  %s15 = scalar_select 0, %s14, %s12
  %v16 = vstv %s10
  %17 = vst [vmem:[#allocation2] sm:$0x1] %v16
  $region1: #{tpu_custom_call.1} parent=0
    #allocation3 [shape = 'u8[4096]{0}', space=vmem, size = 0x1000, scoped, tag = 'input window, operand 0, single buffered']
    #allocation4 [shape = 's32[1]{0}', space=sflag, size = 0x4, scoped, tag = 'scoped memory for tpu_custom_call.1']
    #allocation5 [shape = 's32[1]{0}', space=sflag, size = 0x4, scoped, tag = 'scoped memory for tpu_custom_call.1']
    #allocation6 [shape = 'u8[16384]{0}', space=vmem, size = 0x4000, scoped, tag = 'input window, operand 3, single buffered']
    #allocation7 [shape = 's32[1]{0}', space=sflag, size = 0x4, scoped, tag = 'scoped memory for tpu_custom_call.1']
    #allocation8 [shape = 'u8[16384]{0}', space=vmem, size = 0x4000, scoped, tag = 'input window, operand 7, single buffered']
    #allocation9 [shape = 'u8[512]{0}', space=vmem, size = 0x400, scoped, tag = 'output window, operand 0, single buffered']
    %18 = vsyncpa [#allocation4], 0
    %19 = vsyncpa [#allocation7], 0
    %20 = vsyncpa [#allocation5], 0
    // Predicated region
    $region2: #{tpu_custom_call.1} parent=1 // pred_check
      _
    $region3: #{tpu_custom_call.1} parent=1 // pred_check_branch
      %22 = sbr.rel (0) target = $region5
    $region4: #{tpu_custom_call.1} parent=1 // pred_region
      %s24 = ssub.s32 128, 128
      %25 = vsyncadd [#allocation4], %s24
      %s27 = sshll.u32 [#allocation3], 4
      %s28 = int_to_ptr.vmem [resolvable:$true] %s27
      %30 = dma.hbm_to_vmem [thread:$0]  %s0, 128, %s28, [#allocation4]
    $region5: #{tpu_custom_call.1} parent=1 // pred_fallthru
      _
    // Predicated region
    $region6: #{tpu_custom_call.1} parent=1 // pred_check
      _
    $region7: #{tpu_custom_call.1} parent=1 // pred_check_branch
      %32 = sbr.rel (0) target = $region9
    $region8: #{tpu_custom_call.1} parent=1 // pred_region
      _
    $region9: #{tpu_custom_call.1} parent=1 // pred_fallthru
      _
    // Predicated region
    $region10: #{tpu_custom_call.1} parent=1 // pred_check
      _
    $region11: #{tpu_custom_call.1} parent=1 // pred_check_branch
      %34 = sbr.rel (0) target = $region13
    $region12: #{tpu_custom_call.1} parent=1 // pred_region
      _
    $region13: #{tpu_custom_call.1} parent=1 // pred_fallthru
      _
    // Predicated region
    $region14: #{tpu_custom_call.1} parent=1 // pred_check
      _
    $region15: #{tpu_custom_call.1} parent=1 // pred_check_branch
      %36 = sbr.rel (0) target = $region17
    $region16: #{tpu_custom_call.1} parent=1 // pred_region
      %s38 = ssub.s32 512, 512
      %39 = vsyncadd [#allocation7], %s38
      %s40 = sshll.u32 [#allocation6], 4
      %s41 = int_to_ptr.vmem [resolvable:$true] %s40
      %46 = dma.hbm_to_vmem [thread:$0]  %s3, 512, %s41, [#allocation7], 128, 128, 8
    $region17: #{tpu_custom_call.1} parent=1 // pred_fallthru
      _
    // Predicated region
    $region18: #{tpu_custom_call.1} parent=1 // pred_check
      _
    $region19: #{tpu_custom_call.1} parent=1 // pred_check_branch
      %48 = sbr.rel (0) target = $region21
    $region20: #{tpu_custom_call.1} parent=1 // pred_region
      _
    $region21: #{tpu_custom_call.1} parent=1 // pred_fallthru
      _
    // Predicated region
    $region22: #{tpu_custom_call.1} parent=1 // pred_check
      _
    $region23: #{tpu_custom_call.1} parent=1 // pred_check_branch
      %50 = sbr.rel (0) target = $region25
    $region24: #{tpu_custom_call.1} parent=1 // pred_region
      _
    $region25: #{tpu_custom_call.1} parent=1 // pred_fallthru
      _
    // Predicated region
    $region26: #{tpu_custom_call.1} parent=1 // pred_check
      _
    $region27: #{tpu_custom_call.1} parent=1 // pred_check_branch
      %52 = sbr.rel (0) target = $region29
    $region28: #{tpu_custom_call.1} parent=1 // pred_region
      _
    $region29: #{tpu_custom_call.1} parent=1 // pred_fallthru
      _
    // Predicated region
    $region30: #{tpu_custom_call.1} parent=1 // pred_check
      _
    $region31: #{tpu_custom_call.1} parent=1 // pred_check_branch
      %54 = sbr.rel (0) target = $region33
    $region32: #{tpu_custom_call.1} parent=1 // pred_region
      %s56 = ssub.s32 512, 512
      %57 = vsyncadd [#allocation7], %s56
      %s58 = sshll.u32 [#allocation8], 4
      %s59 = int_to_ptr.vmem [resolvable:$true] %s58
      %64 = dma.hbm_to_vmem [thread:$0]  %s7, 512, %s59, [#allocation7], 128, 128, 8
    $region33: #{tpu_custom_call.1} parent=1 // pred_fallthru
      _
    // Predicated region
    $region34: #{tpu_custom_call.1} parent=1 // pred_check
      _
    $region35: #{tpu_custom_call.1} parent=1 // pred_check_branch
      %66 = sbr.rel (0) target = $region37
    $region36: #{tpu_custom_call.1} parent=1 // pred_region
      _
    $region37: #{tpu_custom_call.1} parent=1 // pred_fallthru
      _
    // Predicated region
    $region38: #{tpu_custom_call.1} parent=1 // pred_check
      _
    $region39: #{tpu_custom_call.1} parent=1 // pred_check_branch
      %68 = sbr.rel (0) target = $region41
    $region40: #{tpu_custom_call.1} parent=1 // pred_region
      _
    $region41: #{tpu_custom_call.1} parent=1 // pred_fallthru
      _
    // Predicated region
    $region42: #{tpu_custom_call.1} parent=1 // pred_check
      _
    $region43: #{tpu_custom_call.1} parent=1 // pred_check_branch
      %70 = sbr.rel (0) target = $region45
    $region44: #{tpu_custom_call.1} parent=1 // pred_region
      _
    $region45: #{tpu_custom_call.1} parent=1 // pred_fallthru
      _
    // Predicated region
    $region46: #{tpu_custom_call.1} parent=1 // pred_check
      _
    $region47: #{tpu_custom_call.1} parent=1 // pred_check_branch
      %72 = sbr.rel (0) target = $region49
    $region48: #{tpu_custom_call.1} parent=1 // pred_region
      %73 = dma.done [#allocation4], 128
    $region49: #{tpu_custom_call.1} parent=1 // pred_fallthru
      _
    // Predicated region
    $region50: #{tpu_custom_call.1} parent=1 // pred_check
      _
    $region51: #{tpu_custom_call.1} parent=1 // pred_check_branch
      %75 = sbr.rel (0) target = $region53
    $region52: #{tpu_custom_call.1} parent=1 // pred_region
      %76 = dma.done [#allocation7], 512
    $region53: #{tpu_custom_call.1} parent=1 // pred_fallthru
      _
    // Predicated region
    $region54: #{tpu_custom_call.1} parent=1 // pred_check
      _
    $region55: #{tpu_custom_call.1} parent=1 // pred_check_branch
      %78 = sbr.rel (0) target = $region57
    $region56: #{tpu_custom_call.1} parent=1 // pred_region
      %79 = dma.done [#allocation7], 512
    $region57: #{tpu_custom_call.1} parent=1 // pred_fallthru
      _
    %v80 = vld [vmem:[#allocation3] sm:$0xff]
    %vm81 = vcmask 261120
    %v82 = vsel %vm81, %v80, 0.0
    %v83 = vrot.slane %v82, 4
    %v84 = vadd.f32 %v82, %v83
    %v85 = vrot.slane %v84, 2
    %v86 = vadd.f32 %v84, %v85
    %v87 = vrot.slane %v86, 1
    %v88 = vadd.f32 %v86, %v87
    %v89 = vmul.f32 %v88, 0.125
    %v90 = vmul.f32 %v80, %v80
    %v91 = vsel %vm81, %v90, 0.0
    %v92 = vrot.slane %v91, 4
    %v93 = vadd.f32 %v91, %v92
    %v94 = vrot.slane %v93, 2
    %v95 = vadd.f32 %v93, %v94
    %v96 = vrot.slane %v95, 1
    %v97 = vadd.f32 %v95, %v96
    %v98 = vmul.f32 %v97, 0.125
    %v99 = vmul.f32 %v89, %v89
    %v100 = vsub.f32 %v98, %v99
    %v101 = vld [vmem:[%s1] sm:$0x1]
    %v102 = vadd.f32 %v100, 1e-05
    %v103 = vrsqrt.pop %v102
    %v104 = vmul.f32 %v101, %v103
    %v105 = vld [vmem:[%s4] sm:$0x1]
    %v106 = vld [vmem:[%s2] sm:$0x1]
    %v107 = vmul.f32 %v89, %v104
    %v108 = vsub.f32 %v106, %v107
    %v109 = vld [vmem:[#allocation6] sm:$0xff]
    %v110 = vld [vmem:[#allocation6 + $0x8] sm:$0xff]
    %v111 = vld [vmem:[#allocation6 + $0x10] sm:$0xff]
    %v112 = vld [vmem:[#allocation6 + $0x18] sm:$0xff]
    %v114 = vsel %vm81, %v108, 0
    %116 = vmatprep.subr.mxu0 0.0
    %117 = vmatpush1.msra.mxu0 %v109
    %118 = vmatprep.subr.mxu0 0.0
    %119 = vmatpush1.msra.mxu0 %v110
    %120 = vmatprep.subr.mxu0 0.0
    %121 = vmatpush1.msra.mxu0 %v111
    %122 = vmatprep.subr.mxu0 0.0
    %123 = vmatpush1.msra.mxu0 %v112
    %124 = vmatprep.subr.mxu0 0.0
    %125 = vmatpush1.msra.mxu0 0.0
    %126 = vmatprep.subr.mxu0 0.0
    %127 = vmatpush1.msra.mxu0 0.0
    %128 = vmatprep.subr.mxu0 0.0
    %129 = vmatpush1.msra.mxu0 0.0
    %130 = vmatprep.subr.mxu0 0.0
    %131 = vmatpush1.msra.mxu0 0.0
    %132 = vmatprep.subr.mxu0 0.0
    %133 = vmatpush1.msra.mxu0 0.0
    %134 = vmatprep.subr.mxu0 0.0
    %135 = vmatpush1.msra.mxu0 0.0
    %136 = vmatprep.subr.mxu0 0.0
    %137 = vmatpush1.msra.mxu0 0.0
    %138 = vmatprep.subr.mxu0 0.0
    %139 = vmatpush1.msra.mxu0 0.0
    %140 = vmatprep.subr.mxu0 0.0
    %141 = vmatpush1.msra.mxu0 0.0
    %142 = vmatprep.subr.mxu0 0.0
    %143 = vmatpush1.msra.mxu0 0.0
    %144 = vmatprep.subr.mxu0 0.0
    %145 = vmatpush1.msra.mxu0 0.0
    %146 = vmatprep.subr.mxu0 0.0
    %147 = vmatpush1.msra.mxu0 0.0
    %148 = vmatprep.subr.mxu0 0.0
    %149 = vmatpush1.msra.mxu0 0.0
    %150 = vmatprep.subr.mxu0 0.0
    %151 = vmatpush1.msra.mxu0 0.0
    %152 = vmatprep.subr.mxu0 0.0
    %153 = vmatpush1.msra.mxu0 0.0
    %154 = vmatprep.subr.mxu0 0.0
    %155 = vmatpush1.msra.mxu0 0.0
    %156 = vmatprep.subr.mxu0 0.0
    %157 = vmatpush1.msra.mxu0 0.0
    %158 = vmatprep.subr.mxu0 0.0
    %159 = vmatpush1.msra.mxu0 0.0
    %160 = vmatprep.subr.mxu0 0.0
    %161 = vmatpush1.msra.mxu0 0.0
    %162 = vmatprep.subr.mxu0 0.0
    %163 = vmatpush1.msra.mxu0 0.0
    %164 = vmatprep.subr.mxu0 0.0
    %165 = vmatpush1.msra.mxu0 0.0
    %166 = vmatprep.subr.mxu0 0.0
    %167 = vmatpush1.msra.mxu0 0.0
    %168 = vmatprep.subr.mxu0 0.0
    %169 = vmatpush1.msra.mxu0 0.0
    %170 = vmatprep.subr.mxu0 0.0
    %171 = vmatpush1.msra.mxu0 0.0
    %172 = vmatprep.subr.mxu0 0.0
    %173 = vmatpush1.msra.mxu0 0.0
    %174 = vmatprep.subr.mxu0 0.0
    %175 = vmatpush1.msra.mxu0 0.0
    %176 = vmatprep.subr.mxu0 0.0
    %177 = vmatpush1.msra.mxu0 0.0
    %178 = vmatprep.subr.mxu0 0.0
    %179 = vmatpush1.msra.mxu0 0.0
    %180 = vmatprep.mubr.f32.mxu0 0.0
    %181 = vmatmul.mubr.f32.gmra.mrb[0].mxu0 %v114
    %v182 = vpop.f32.mrb[0].mxu0
    %v183 = vadd.f32 0.0, %v182
    %v184 = vpop.f32.mrb[0].mxu0
    %185 = vdwg.mxu0
    %v186 = vadd.f32 %v105, %v183
    %v188 = vlaneseq
    %v189 = vshrl.u32 %v188, 7
    %v190 = vsub.s32 0, %v189
    %v191 = vrot.slane %v104, %v190
    %v193 = vmul.f32 %v80, %v191
    %v195 = vlaneseq
    %v196 = vshrl.u32 %v195, 7
    %v197 = vsub.s32 0, %v196
    %v198 = vrot.slane %v186, %v197
    %v201 = vsel %vm81, %v193, 0
    %203 = vmatprep.subr.mxu0 0.0
    %204 = vmatpush1.msra.mxu0 %v109
    %205 = vmatprep.subr.mxu0 0.0
    %206 = vmatpush1.msra.mxu0 %v110
    %207 = vmatprep.subr.mxu0 0.0
    %208 = vmatpush1.msra.mxu0 %v111
    %209 = vmatprep.subr.mxu0 0.0
    %210 = vmatpush1.msra.mxu0 %v112
    %211 = vmatprep.subr.mxu0 0.0
    %212 = vmatpush1.msra.mxu0 0.0
    %213 = vmatprep.subr.mxu0 0.0
    %214 = vmatpush1.msra.mxu0 0.0
    %215 = vmatprep.subr.mxu0 0.0
    %216 = vmatpush1.msra.mxu0 0.0
    %217 = vmatprep.subr.mxu0 0.0
    %218 = vmatpush1.msra.mxu0 0.0
    %219 = vmatprep.subr.mxu0 0.0
    %220 = vmatpush1.msra.mxu0 0.0
    %221 = vmatprep.subr.mxu0 0.0
    %222 = vmatpush1.msra.mxu0 0.0
    %223 = vmatprep.subr.mxu0 0.0
    %224 = vmatpush1.msra.mxu0 0.0
    %225 = vmatprep.subr.mxu0 0.0
    %226 = vmatpush1.msra.mxu0 0.0
    %227 = vmatprep.subr.mxu0 0.0
    %228 = vmatpush1.msra.mxu0 0.0
    %229 = vmatprep.subr.mxu0 0.0
    %230 = vmatpush1.msra.mxu0 0.0
    %231 = vmatprep.subr.mxu0 0.0
    %232 = vmatpush1.msra.mxu0 0.0
    %233 = vmatprep.subr.mxu0 0.0
    %234 = vmatpush1.msra.mxu0 0.0
    %235 = vmatprep.subr.mxu0 0.0
    %236 = vmatpush1.msra.mxu0 0.0
    %237 = vmatprep.subr.mxu0 0.0
    %238 = vmatpush1.msra.mxu0 0.0
    %239 = vmatprep.subr.mxu0 0.0
    %240 = vmatpush1.msra.mxu0 0.0
    %241 = vmatprep.subr.mxu0 0.0
    %242 = vmatpush1.msra.mxu0 0.0
    %243 = vmatprep.subr.mxu0 0.0
    %244 = vmatpush1.msra.mxu0 0.0
    %245 = vmatprep.subr.mxu0 0.0
    %246 = vmatpush1.msra.mxu0 0.0
    %247 = vmatprep.subr.mxu0 0.0
    %248 = vmatpush1.msra.mxu0 0.0
    %249 = vmatprep.subr.mxu0 0.0
    %250 = vmatpush1.msra.mxu0 0.0
    %251 = vmatprep.subr.mxu0 0.0
    %252 = vmatpush1.msra.mxu0 0.0
    %253 = vmatprep.subr.mxu0 0.0
    %254 = vmatpush1.msra.mxu0 0.0
    %255 = vmatprep.subr.mxu0 0.0
    %256 = vmatpush1.msra.mxu0 0.0
    %257 = vmatprep.subr.mxu0 0.0
    %258 = vmatpush1.msra.mxu0 0.0
    %259 = vmatprep.subr.mxu0 0.0
    %260 = vmatpush1.msra.mxu0 0.0
    %261 = vmatprep.subr.mxu0 0.0
    %262 = vmatpush1.msra.mxu0 0.0
    %263 = vmatprep.subr.mxu0 0.0
    %264 = vmatpush1.msra.mxu0 0.0
    %265 = vmatprep.subr.mxu0 0.0
    %266 = vmatpush1.msra.mxu0 0.0
    %267 = vmatprep.mubr.f32.mxu0 0.0
    %268 = vmatmul.mubr.f32.gmra.mrb[0].mxu0 %v201
    %v269 = vpop.f32.mrb[0].mxu0
    %v270 = vadd.f32 %v198, %v269
    %v271 = vpop.f32.mrb[0].mxu0
    %272 = vdwg.mxu0
    %vm273 = vcmp.gt.f32.partialorder %v270, 0.0
    %v274 = vmul.f32 %v270, 0.01
    %v275 = vsel %vm273, %v270, %v274
    %v276 = vsel %vm81, %v275, 0.0
    %v277 = vrot.slane %v276, 4
    %v278 = vadd.f32 %v276, %v277
    %v279 = vrot.slane %v278, 2
    %v280 = vadd.f32 %v278, %v279
    %v281 = vrot.slane %v280, 1
    %v282 = vadd.f32 %v280, %v281
    %v283 = vmul.f32 %v282, 0.125
    %v284 = vmul.f32 %v275, %v275
    %v285 = vsel %vm81, %v284, 0.0
    %v286 = vrot.slane %v285, 4
    %v287 = vadd.f32 %v285, %v286
    %v288 = vrot.slane %v287, 2
    %v289 = vadd.f32 %v287, %v288
    %v290 = vrot.slane %v289, 1
    %v291 = vadd.f32 %v289, %v290
    %v292 = vmul.f32 %v291, 0.125
    %v293 = vmul.f32 %v283, %v283
    %v294 = vsub.f32 %v292, %v293
    %v295 = vld [vmem:[%s5] sm:$0x1]
    %v296 = vadd.f32 %v294, 1e-05
    %v297 = vrsqrt.pop %v296
    %v298 = vmul.f32 %v295, %v297
    %v299 = vld [vmem:[%s8] sm:$0x1]
    %v300 = vld [vmem:[%s6] sm:$0x1]
    %v301 = vmul.f32 %v283, %v298
    %v302 = vsub.f32 %v300, %v301
    %v303 = vld [vmem:[#allocation8] sm:$0xff]
    %v304 = vld [vmem:[#allocation8 + $0x8] sm:$0xff]
    %v305 = vld [vmem:[#allocation8 + $0x10] sm:$0xff]
    %v306 = vld [vmem:[#allocation8 + $0x18] sm:$0xff]
    %v308 = vsel %vm81, %v302, 0
    %310 = vmatprep.subr.mxu0 0.0
    %311 = vmatpush1.msra.mxu0 %v303
    %312 = vmatprep.subr.mxu0 0.0
    %313 = vmatpush1.msra.mxu0 %v304
    %314 = vmatprep.subr.mxu0 0.0
    %315 = vmatpush1.msra.mxu0 %v305
    %316 = vmatprep.subr.mxu0 0.0
    %317 = vmatpush1.msra.mxu0 %v306
    %318 = vmatprep.subr.mxu0 0.0
    %319 = vmatpush1.msra.mxu0 0.0
    %320 = vmatprep.subr.mxu0 0.0
    %321 = vmatpush1.msra.mxu0 0.0
    %322 = vmatprep.subr.mxu0 0.0
    %323 = vmatpush1.msra.mxu0 0.0
    %324 = vmatprep.subr.mxu0 0.0
    %325 = vmatpush1.msra.mxu0 0.0
    %326 = vmatprep.subr.mxu0 0.0
    %327 = vmatpush1.msra.mxu0 0.0
    %328 = vmatprep.subr.mxu0 0.0
    %329 = vmatpush1.msra.mxu0 0.0
    %330 = vmatprep.subr.mxu0 0.0
    %331 = vmatpush1.msra.mxu0 0.0
    %332 = vmatprep.subr.mxu0 0.0
    %333 = vmatpush1.msra.mxu0 0.0
    %334 = vmatprep.subr.mxu0 0.0
    %335 = vmatpush1.msra.mxu0 0.0
    %336 = vmatprep.subr.mxu0 0.0
    %337 = vmatpush1.msra.mxu0 0.0
    %338 = vmatprep.subr.mxu0 0.0
    %339 = vmatpush1.msra.mxu0 0.0
    %340 = vmatprep.subr.mxu0 0.0
    %341 = vmatpush1.msra.mxu0 0.0
    %342 = vmatprep.subr.mxu0 0.0
    %343 = vmatpush1.msra.mxu0 0.0
    %344 = vmatprep.subr.mxu0 0.0
    %345 = vmatpush1.msra.mxu0 0.0
    %346 = vmatprep.subr.mxu0 0.0
    %347 = vmatpush1.msra.mxu0 0.0
    %348 = vmatprep.subr.mxu0 0.0
    %349 = vmatpush1.msra.mxu0 0.0
    %350 = vmatprep.subr.mxu0 0.0
    %351 = vmatpush1.msra.mxu0 0.0
    %352 = vmatprep.subr.mxu0 0.0
    %353 = vmatpush1.msra.mxu0 0.0
    %354 = vmatprep.subr.mxu0 0.0
    %355 = vmatpush1.msra.mxu0 0.0
    %356 = vmatprep.subr.mxu0 0.0
    %357 = vmatpush1.msra.mxu0 0.0
    %358 = vmatprep.subr.mxu0 0.0
    %359 = vmatpush1.msra.mxu0 0.0
    %360 = vmatprep.subr.mxu0 0.0
    %361 = vmatpush1.msra.mxu0 0.0
    %362 = vmatprep.subr.mxu0 0.0
    %363 = vmatpush1.msra.mxu0 0.0
    %364 = vmatprep.subr.mxu0 0.0
    %365 = vmatpush1.msra.mxu0 0.0
    %366 = vmatprep.subr.mxu0 0.0
    %367 = vmatpush1.msra.mxu0 0.0
    %368 = vmatprep.subr.mxu0 0.0
    %369 = vmatpush1.msra.mxu0 0.0
    %370 = vmatprep.subr.mxu0 0.0
    %371 = vmatpush1.msra.mxu0 0.0
    %372 = vmatprep.subr.mxu0 0.0
    %373 = vmatpush1.msra.mxu0 0.0
    %374 = vmatprep.mubr.f32.mxu0 0.0
    %375 = vmatmul.mubr.f32.gmra.mrb[0].mxu0 %v308
    %v376 = vpop.f32.mrb[0].mxu0
    %v377 = vadd.f32 0.0, %v376
    %v378 = vpop.f32.mrb[0].mxu0
    %379 = vdwg.mxu0
    %v380 = vadd.f32 %v299, %v377
    %v382 = vlaneseq
    %v383 = vshrl.u32 %v382, 7
    %v384 = vsub.s32 0, %v383
    %v385 = vrot.slane %v298, %v384
    %v387 = vmul.f32 %v275, %v385
    %v389 = vlaneseq
    %v390 = vshrl.u32 %v389, 7
    %v391 = vsub.s32 0, %v390
    %v392 = vrot.slane %v380, %v391
    %v395 = vsel %vm81, %v387, 0
    %397 = vmatprep.subr.mxu0 0.0
    %398 = vmatpush1.msra.mxu0 %v303
    %399 = vmatprep.subr.mxu0 0.0
    %400 = vmatpush1.msra.mxu0 %v304
    %401 = vmatprep.subr.mxu0 0.0
    %402 = vmatpush1.msra.mxu0 %v305
    %403 = vmatprep.subr.mxu0 0.0
    %404 = vmatpush1.msra.mxu0 %v306
    %405 = vmatprep.subr.mxu0 0.0
    %406 = vmatpush1.msra.mxu0 0.0
    %407 = vmatprep.subr.mxu0 0.0
    %408 = vmatpush1.msra.mxu0 0.0
    %409 = vmatprep.subr.mxu0 0.0
    %410 = vmatpush1.msra.mxu0 0.0
    %411 = vmatprep.subr.mxu0 0.0
    %412 = vmatpush1.msra.mxu0 0.0
    %413 = vmatprep.subr.mxu0 0.0
    %414 = vmatpush1.msra.mxu0 0.0
    %415 = vmatprep.subr.mxu0 0.0
    %416 = vmatpush1.msra.mxu0 0.0
    %417 = vmatprep.subr.mxu0 0.0
    %418 = vmatpush1.msra.mxu0 0.0
    %419 = vmatprep.subr.mxu0 0.0
    %420 = vmatpush1.msra.mxu0 0.0
    %421 = vmatprep.subr.mxu0 0.0
    %422 = vmatpush1.msra.mxu0 0.0
    %423 = vmatprep.subr.mxu0 0.0
    %424 = vmatpush1.msra.mxu0 0.0
    %425 = vmatprep.subr.mxu0 0.0
    %426 = vmatpush1.msra.mxu0 0.0
    %427 = vmatprep.subr.mxu0 0.0
    %428 = vmatpush1.msra.mxu0 0.0
    %429 = vmatprep.subr.mxu0 0.0
    %430 = vmatpush1.msra.mxu0 0.0
    %431 = vmatprep.subr.mxu0 0.0
    %432 = vmatpush1.msra.mxu0 0.0
    %433 = vmatprep.subr.mxu0 0.0
    %434 = vmatpush1.msra.mxu0 0.0
    %435 = vmatprep.subr.mxu0 0.0
    %436 = vmatpush1.msra.mxu0 0.0
    %437 = vmatprep.subr.mxu0 0.0
    %438 = vmatpush1.msra.mxu0 0.0
    %439 = vmatprep.subr.mxu0 0.0
    %440 = vmatpush1.msra.mxu0 0.0
    %441 = vmatprep.subr.mxu0 0.0
    %442 = vmatpush1.msra.mxu0 0.0
    %443 = vmatprep.subr.mxu0 0.0
    %444 = vmatpush1.msra.mxu0 0.0
    %445 = vmatprep.subr.mxu0 0.0
    %446 = vmatpush1.msra.mxu0 0.0
    %447 = vmatprep.subr.mxu0 0.0
    %448 = vmatpush1.msra.mxu0 0.0
    %449 = vmatprep.subr.mxu0 0.0
    %450 = vmatpush1.msra.mxu0 0.0
    %451 = vmatprep.subr.mxu0 0.0
    %452 = vmatpush1.msra.mxu0 0.0
    %453 = vmatprep.subr.mxu0 0.0
    %454 = vmatpush1.msra.mxu0 0.0
    %455 = vmatprep.subr.mxu0 0.0
    %456 = vmatpush1.msra.mxu0 0.0
    %457 = vmatprep.subr.mxu0 0.0
    %458 = vmatpush1.msra.mxu0 0.0
    %459 = vmatprep.subr.mxu0 0.0
    %460 = vmatpush1.msra.mxu0 0.0
    %461 = vmatprep.mubr.f32.mxu0 0.0
    %462 = vmatmul.mubr.f32.gmra.mrb[0].mxu0 %v395
    %v463 = vpop.f32.mrb[0].mxu0
    %v464 = vadd.f32 %v392, %v463
    %v465 = vpop.f32.mrb[0].mxu0
    %466 = vdwg.mxu0
    %vm467 = vcmp.gt.f32.partialorder %v464, 0.0
    %v468 = vmul.f32 %v464, 0.01
    %v469 = vsel %vm467, %v464, %v468
    %v470 = vld [vmem:[%s9] sm:$0x1]
    %v471 = vld [vmem:[#allocation2] sm:$0x1]
    %473 = vset.pattern.permute.xlu0 0
    %474 = vperm.xlu0 %473, %v471
    %v475 = vpop.permute.xlu0 %474
    %v477 = vlaneseq
    %v478 = vshrl.u32 %v477, 7
    %v479 = vsub.s32 0, %v478
    %v480 = vrot.slane %v475, %v479
    %v482 = vsel %vm81, %v470, 0
    %v485 = vsel %vm81, %v469, 0
    %487 = vmatprep.subr.mxu0 0.0
    %488 = vmatpush1.xpose.msra.mxu0 %v485
    %489 = vmatprep.subr.mxu0 0.0
    %490 = vmatpush1.xpose.msra.mxu0 0.0
    %491 = vmatprep.subr.mxu0 0.0
    %492 = vmatpush1.xpose.msra.mxu0 0.0
    %493 = vmatprep.subr.mxu0 0.0
    %494 = vmatpush1.xpose.msra.mxu0 0.0
    %495 = vmatprep.subr.mxu0 0.0
    %496 = vmatpush1.xpose.msra.mxu0 0.0
    %497 = vmatprep.subr.mxu0 0.0
    %498 = vmatpush1.xpose.msra.mxu0 0.0
    %499 = vmatprep.subr.mxu0 0.0
    %500 = vmatpush1.xpose.msra.mxu0 0.0
    %501 = vmatprep.subr.mxu0 0.0
    %502 = vmatpush1.xpose.msra.mxu0 0.0
    %503 = vmatprep.subr.mxu0 0.0
    %504 = vmatpush1.xpose.msra.mxu0 0.0
    %505 = vmatprep.subr.mxu0 0.0
    %506 = vmatpush1.xpose.msra.mxu0 0.0
    %507 = vmatprep.subr.mxu0 0.0
    %508 = vmatpush1.xpose.msra.mxu0 0.0
    %509 = vmatprep.subr.mxu0 0.0
    %510 = vmatpush1.xpose.msra.mxu0 0.0
    %511 = vmatprep.subr.mxu0 0.0
    %512 = vmatpush1.xpose.msra.mxu0 0.0
    %513 = vmatprep.subr.mxu0 0.0
    %514 = vmatpush1.xpose.msra.mxu0 0.0
    %515 = vmatprep.subr.mxu0 0.0
    %516 = vmatpush1.xpose.msra.mxu0 0.0
    %517 = vmatprep.subr.mxu0 0.0
    %518 = vmatpush1.xpose.msra.mxu0 0.0
    %519 = vmatprep.subr.mxu0 0.0
    %520 = vmatpush1.xpose.msra.mxu0 0.0
    %521 = vmatprep.subr.mxu0 0.0
    %522 = vmatpush1.xpose.msra.mxu0 0.0
    %523 = vmatprep.subr.mxu0 0.0
    %524 = vmatpush1.xpose.msra.mxu0 0.0
    %525 = vmatprep.subr.mxu0 0.0
    %526 = vmatpush1.xpose.msra.mxu0 0.0
    %527 = vmatprep.subr.mxu0 0.0
    %528 = vmatpush1.xpose.msra.mxu0 0.0
    %529 = vmatprep.subr.mxu0 0.0
    %530 = vmatpush1.xpose.msra.mxu0 0.0
    %531 = vmatprep.subr.mxu0 0.0
    %532 = vmatpush1.xpose.msra.mxu0 0.0
    %533 = vmatprep.subr.mxu0 0.0
    %534 = vmatpush1.xpose.msra.mxu0 0.0
    %535 = vmatprep.subr.mxu0 0.0
    %536 = vmatpush1.xpose.msra.mxu0 0.0
    %537 = vmatprep.subr.mxu0 0.0
    %538 = vmatpush1.xpose.msra.mxu0 0.0
    %539 = vmatprep.subr.mxu0 0.0
    %540 = vmatpush1.xpose.msra.mxu0 0.0
    %541 = vmatprep.subr.mxu0 0.0
    %542 = vmatpush1.xpose.msra.mxu0 0.0
    %543 = vmatprep.subr.mxu0 0.0
    %544 = vmatpush1.xpose.msra.mxu0 0.0
    %545 = vmatprep.subr.mxu0 0.0
    %546 = vmatpush1.xpose.msra.mxu0 0.0
    %547 = vmatprep.subr.mxu0 0.0
    %548 = vmatpush1.xpose.msra.mxu0 0.0
    %549 = vmatprep.subr.mxu0 0.0
    %550 = vmatpush1.xpose.msra.mxu0 0.0
    %551 = vmatprep.mubr.f32.mxu0 0.0
    %552 = vmatmul.mubr.f32.gmra.mrb[0].mxu0 %v482
    %v553 = vpop.f32.mrb[0].mxu0
    %v554 = vadd.f32 %v480, %v553
    %v555 = vpop.f32.mrb[0].mxu0
    %556 = vdwg.mxu0
    %v557 = vxor.u32 %v554, 2147483648
    %v558 = vmul.f32 %v557, 1.442695
    %v559 = vpow.pop %v558
    %v560 = vadd.f32 %v559, 1.0
    %v561 = vrcp.pop %v560
    %v562 = vmul.f32 1.0, %v561
    %vm563 = vcmask 57344
    %564 = vst.msk [vmem:[#allocation9] sm:$0x1] %vm563, %v562
    // Predicated region
    $region58: #{tpu_custom_call.1} parent=1 // pred_check
      _
    $region59: #{tpu_custom_call.1} parent=1 // pred_check_branch
      %566 = sbr.rel (0) target = $region61
    $region60: #{tpu_custom_call.1} parent=1 // pred_region
      %s568 = ssub.s32 16, 16
      %569 = vsyncadd [#allocation5], %s568
      %s571 = sshll.u32 [#allocation9], 4
      %s572 = int_to_ptr.vmem [resolvable:$true] %s571
      %574 = dma.vmem_to_hbm [thread:$0]  %s572, 16, %s11, [#allocation5]
    $region61: #{tpu_custom_call.1} parent=1 // pred_fallthru
      _
    // Predicated region
    $region62: #{tpu_custom_call.1} parent=1 // pred_check
      _
    $region63: #{tpu_custom_call.1} parent=1 // pred_check_branch
      %576 = sbr.rel (0) target = $region65
    $region64: #{tpu_custom_call.1} parent=1 // pred_region
      %577 = dma.done [#allocation5], 16
    $region65: #{tpu_custom_call.1} parent=1 // pred_fallthru
      _
    %578 = vsyncpa [#allocation4], 1
    %579 = vsyncpa [#allocation7], 1
    %580 = vsyncpa [#allocation5], 1

</llo_original>
